<compile_context>
chip_gen: v5e
topology: v5e:2x2
jax: 0.10.0
libtpu: 0.0.40
codegen_flags: <defaults>
</compile_context>

<pallas_src>
import functools

import jax
import jax.numpy as jnp
import numpy as np
from jax import lax
from jax.experimental import pallas as pl
from jax.experimental.pallas import tpu as pltpu


def _msconv_kernel(x_ref, wc_ref, pb_ref, o_ref, *, H, W):
    """Fused depthwise-3x3 + pointwise-1x1 conv for one image.

    x_ref  : (Cin_p, H*W)     flat-NCHW input block (lane-dense)
    wc_ref : (Cout, 9*Cin_p)  im2col-fused weights dw[ci,ky,kx]*pw[co,ci], tap-major
    pb_ref : (Cout, 1)        fused bias pb + pw @ db  (f32)
    o_ref  : (Cout, H*W)      output block, flat-NCHW layout (lane-dense)
    """
    Cin_p, HW = x_ref.shape
    x = x_ref[...]
    zeros = jnp.zeros_like(x)

    # Flat pixel index p = h*W + w (broadcast over channel sublanes).
    pos = lax.broadcasted_iota(jnp.int32, (Cin_p, HW), 1)
    if W & (W - 1) == 0:
        col = pos & (W - 1)          # w = p % W  (power-of-two fast path)
    else:
        col = pos % W
    row_ok = {-1: pos >= W, 0: None, 1: pos < (H - 1) * W}
    col_ok = {-1: col >= 1, 0: None, 1: col < (W - 1)}

    # Build the 9 shifted+masked taps (XLU rolls + VPU selects) and stack them
    # into one (9*Cin_p, H*W) im2col operand for a single MXU matmul.
    taps = []
    for dy in (-1, 0, 1):
        for dx in (-1, 0, 1):
            delta = dy * W + dx      # out[p] needs x[p + delta]
            tap = x if delta == 0 else pltpu.roll(x, shift=(-delta) % HW, axis=1)
            mask = row_ok[dy]
            if col_ok[dx] is not None:
                mask = col_ok[dx] if mask is None else (mask & col_ok[dx])
            if mask is not None:
                tap = jnp.where(mask, tap, zeros)
            taps.append(tap)
    patches = jnp.concatenate(taps, axis=0)                  # (9*Cin_p, HW)

    acc = jnp.dot(wc_ref[...], patches,
                  preferred_element_type=jnp.float32)        # (Cout, HW)
    o_ref[...] = (acc + pb_ref[...]).astype(o_ref.dtype)


def msconv_pallas(x_nchw, dw, db, pw, pb):
    """x_nchw: (N, Cin, H, W).  Returns (N, Cout, H, W).

    dw: (Cin, 1, 3, 3)    depthwise conv weight (PyTorch layout)
    db: (Cin,)            depthwise conv bias
    pw: (Cout, Cin, 1, 1) pointwise conv weight (PyTorch layout)
    pb: (Cout,)           pointwise conv bias
    """
    N, Cin, H, W = x_nchw.shape
    Cout = pw.shape[0]
    HW = H * W
    dtype = x_nchw.dtype
    itemsize = jnp.dtype(dtype).itemsize

    # Sublane tile rows for this dtype (f32: 8, bf16: 16, int8: 32) so each of
    # the 9 im2col tap chunks is sublane-aligned inside the kernel.
    row_tile = 8 * max(1, 4 // itemsize)
    Cin_p = ((Cin + row_tile - 1) // row_tile) * row_tile

    # Free reshape to flat-NCHW (row-major compatible); zero-pad channels only
    # when Cin is not already sublane-aligned.
    x_flat = x_nchw.reshape(N, Cin, HW)
    if Cin_p != Cin:
        x_flat = jnp.pad(x_flat, ((0, 0), (0, Cin_p - Cin), (0, 0)))

    # Host-side algebraic fusion of the two convs (tiny one-time cost):
    #   y = sum_t (pw * dw[t]) @ patch_t + (pb + pw @ db)
    pw2d = pw[:, :, 0, 0].astype(jnp.float32)                 # (Cout, Cin)
    dw3 = dw[:, 0, :, :].astype(jnp.float32)                  # (Cin, 3, 3)
    wk = jnp.transpose(dw3, (1, 2, 0)).reshape(9, Cin)        # (9, Cin) tap-major (ky, kx)
    wc = pw2d[:, None, :] * wk[None, :, :]                    # (Cout, 9, Cin)
    if Cin_p != Cin:
        wc = jnp.pad(wc, ((0, 0), (0, 0), (0, Cin_p - Cin)))
    # NOTE: casting the fused product to bf16 would add one extra rounding vs.
    # running the two convs separately; exact for f32 inputs.
    wc = wc.reshape(Cout, 9 * Cin_p).astype(dtype)
    pb_fold = (pb.astype(jnp.float32)
               + pw2d @ db.astype(jnp.float32)).reshape(Cout, 1)

    # One image per grid step, batch axis fully parallel: >=2 steps for N>=2
    # feeds both v7x TensorCores and lets input prefetch hide behind compute.
    grid = (N,)

    in_block = Cin_p * HW * itemsize
    out_block = Cout * HW * itemsize
    w_bytes = Cout * 9 * Cin_p * itemsize + Cout * 4
    # Double-buffered in/out blocks + weights + im2col intermediates, with
    # headroom; capped well under v7x's 64 MiB per-core VMEM.
    vmem_need = 2 * (in_block + out_block) + w_bytes + 10 * in_block
    vmem_limit = int(min(max(4 * vmem_need, 4 << 20), 32 << 20))

    cost = pl.CostEstimate(
        flops=2 * N * HW * 9 * Cin_p * Cout,
        transcendentals=0,
        bytes_accessed=N * (in_block + out_block) + w_bytes,
    )

    out_flat = pl.pallas_call(
        functools.partial(_msconv_kernel, H=H, W=W),
        out_shape=jax.ShapeDtypeStruct((N, Cout, HW), dtype),
        grid=grid,
        in_specs=[
            pl.BlockSpec((None, Cin_p, HW), lambda n: (n, 0, 0)),
            pl.BlockSpec((Cout, 9 * Cin_p), lambda n: (0, 0)),
            pl.BlockSpec((Cout, 1), lambda n: (0, 0)),
        ],
        out_specs=pl.BlockSpec((None, Cout, HW), lambda n: (n, 0, 0)),
        compiler_params=pltpu.CompilerParams(
            dimension_semantics=("parallel",),
            vmem_limit_bytes=vmem_limit,
        ),
        cost_estimate=cost,
    )(x_flat, wc, pb_fold)

    # Free (row-major compatible) reshape back to NCHW.
    return out_flat.reshape(N, Cout, H, W)


def _reference_msconv(x_nchw, dw, db, pw, pb):
    """Pure-JAX (XLA conv) reference for correctness checking."""
    Cin = x_nchw.shape[1]
    out = lax.conv_general_dilated(
        x_nchw, dw, window_strides=(1, 1), padding=((1, 1), (1, 1)),
        dimension_numbers=("NCHW", "OIHW", "NCHW"),
        feature_group_count=Cin)
    out = out + db.reshape(1, -1, 1, 1)
    out = lax.conv_general_dilated(
        out, pw, window_strides=(1, 1), padding=((0, 0), (0, 0)),
        dimension_numbers=("NCHW", "OIHW", "NCHW"))
    out = out + pb.reshape(1, -1, 1, 1)
    return out


if __name__ == "__main__":
    # Small shapes consistent with the module's forward.
    N, Cin, H, W = 2, 4, 16, 16
    Cout = 8

    key = jax.random.PRNGKey(0)
    k_x, k_dw, k_db, k_pw, k_pb = jax.random.split(key, 5)

    x = jax.random.normal(k_x, (N, Cin, H, W), dtype=jnp.float32)
    dw = jax.random.normal(k_dw, (Cin, 1, 3, 3), dtype=jnp.float32) * 0.1
    db = jax.random.normal(k_db, (Cin,), dtype=jnp.float32) * 0.1
    pw = jax.random.normal(k_pw, (Cout, Cin, 1, 1), dtype=jnp.float32) * 0.1
    pb = jax.random.normal(k_pb, (Cout,), dtype=jnp.float32) * 0.1

    out = msconv_pallas(x, dw, db, pw, pb)
    out = jax.block_until_ready(out)

    ref = jax.block_until_ready(_reference_msconv(x, dw, db, pw, pb))
    assert out.shape == (N, Cout, H, W)
    if not np.allclose(np.asarray(out), np.asarray(ref), atol=1e-4, rtol=1e-4):
        raise AssertionError("Pallas msconv does not match reference")

    print("KERNEL_OK")
</pallas_src>

<mosaic_0001>
module attributes {stable_mosaic.version = 11 : i64} {
  func.func @_msconv_kernel(%arg0: i32, %arg1: memref<1x8x256xf32, #tpu.memory_space<vmem>>, %arg2: memref<8x72xf32, #tpu.memory_space<vmem>>, %arg3: memref<8x1xf32, #tpu.memory_space<vmem>>, %arg4: memref<1x8x256xf32, #tpu.memory_space<vmem>>) attributes {dimension_semantics = [#tpu.dimension_semantics<parallel>], iteration_bounds = array<i64: 2>, scalar_prefetch = 0 : i64, scratch_operands = 0 : i64, tpu.core_type = #tpu.core_type<tc>, window_params = [{transform_indices = @transform_0, window_bounds = array<i64: 1, 8, 256>}, {pipeline_mode = #tpu.pipeline_mode<synchronous>, transform_indices = @transform_1, window_bounds = array<i64: 8, 72>}, {pipeline_mode = #tpu.pipeline_mode<synchronous>, transform_indices = @transform_2, window_bounds = array<i64: 8, 1>}, {transform_indices = @transform_3, window_bounds = array<i64: 1, 8, 256>}]} {
    %c0 = arith.constant 0 : index
    %c0_0 = arith.constant 0 : index
    %c0_1 = arith.constant 0 : index
    %0 = vector.load %arg1[%c0, %c0_0, %c0_1] : memref<1x8x256xf32, #tpu.memory_space<vmem>>, vector<1x8x256xf32>
    %1 = vector.shape_cast %0 : vector<1x8x256xf32> to vector<8x256xf32>
    %cst = arith.constant 0.000000e+00 : f32
    %2 = vector.broadcast %cst : f32 to vector<8x256xf32>
    %3 = tpu.iota {dimensions = array<i32: 1>} : vector<8x256xi32>
    %c15_i32 = arith.constant 15 : i32
    %4 = vector.broadcast %c15_i32 : i32 to vector<8x256xi32>
    %5 = arith.andi %3, %4 : vector<8x256xi32>
    %c16_i32 = arith.constant 16 : i32
    %6 = vector.broadcast %c16_i32 : i32 to vector<8x256xi32>
    %7 = arith.cmpi sge, %3, %6 : vector<8x256xi32>
    %c240_i32 = arith.constant 240 : i32
    %8 = vector.broadcast %c240_i32 : i32 to vector<8x256xi32>
    %9 = arith.cmpi slt, %3, %8 : vector<8x256xi32>
    %c1_i32 = arith.constant 1 : i32
    %10 = vector.broadcast %c1_i32 : i32 to vector<8x256xi32>
    %11 = arith.cmpi sge, %5, %10 : vector<8x256xi32>
    %c15_i32_2 = arith.constant 15 : i32
    %12 = vector.broadcast %c15_i32_2 : i32 to vector<8x256xi32>
    %13 = arith.cmpi slt, %5, %12 : vector<8x256xi32>
    %c17_i32 = arith.constant 17 : i32
    %14 = tpu.dynamic_rotate %1 by %c17_i32 dim 1 : vector<8x256xf32>, i32 -> vector<8x256xf32>
    %15 = arith.andi %7, %11 : vector<8x256xi1>
    %16 = arith.select %15, %14, %2 : vector<8x256xi1>, vector<8x256xf32>
    %c16_i32_3 = arith.constant 16 : i32
    %17 = tpu.dynamic_rotate %1 by %c16_i32_3 dim 1 : vector<8x256xf32>, i32 -> vector<8x256xf32>
    %18 = arith.select %7, %17, %2 : vector<8x256xi1>, vector<8x256xf32>
    %c15_i32_4 = arith.constant 15 : i32
    %19 = tpu.dynamic_rotate %1 by %c15_i32_4 dim 1 : vector<8x256xf32>, i32 -> vector<8x256xf32>
    %20 = arith.andi %7, %13 : vector<8x256xi1>
    %21 = arith.select %20, %19, %2 : vector<8x256xi1>, vector<8x256xf32>
    %c1_i32_5 = arith.constant 1 : i32
    %22 = tpu.dynamic_rotate %1 by %c1_i32_5 dim 1 : vector<8x256xf32>, i32 -> vector<8x256xf32>
    %23 = arith.select %11, %22, %2 : vector<8x256xi1>, vector<8x256xf32>
    %c255_i32 = arith.constant 255 : i32
    %24 = tpu.dynamic_rotate %1 by %c255_i32 dim 1 : vector<8x256xf32>, i32 -> vector<8x256xf32>
    %25 = arith.select %13, %24, %2 : vector<8x256xi1>, vector<8x256xf32>
    %c241_i32 = arith.constant 241 : i32
    %26 = tpu.dynamic_rotate %1 by %c241_i32 dim 1 : vector<8x256xf32>, i32 -> vector<8x256xf32>
    %27 = arith.andi %9, %11 : vector<8x256xi1>
    %28 = arith.select %27, %26, %2 : vector<8x256xi1>, vector<8x256xf32>
    %c240_i32_6 = arith.constant 240 : i32
    %29 = tpu.dynamic_rotate %1 by %c240_i32_6 dim 1 : vector<8x256xf32>, i32 -> vector<8x256xf32>
    %30 = arith.select %9, %29, %2 : vector<8x256xi1>, vector<8x256xf32>
    %c239_i32 = arith.constant 239 : i32
    %31 = tpu.dynamic_rotate %1 by %c239_i32 dim 1 : vector<8x256xf32>, i32 -> vector<8x256xf32>
    %32 = arith.andi %9, %13 : vector<8x256xi1>
    %33 = arith.select %32, %31, %2 : vector<8x256xi1>, vector<8x256xf32>
    %34 = tpu.concatenate %16, %18, %21, %23, %1, %25, %28, %30, %33 in 0 : vector<8x256xf32>, vector<8x256xf32>, vector<8x256xf32>, vector<8x256xf32>, vector<8x256xf32>, vector<8x256xf32>, vector<8x256xf32>, vector<8x256xf32>, vector<8x256xf32> -> vector<72x256xf32>
    %c0_7 = arith.constant 0 : index
    %c0_8 = arith.constant 0 : index
    %35 = vector.load %arg2[%c0_7, %c0_8] : memref<8x72xf32, #tpu.memory_space<vmem>>, vector<8x72xf32>
    %cst_9 = arith.constant dense<0.000000e+00> : vector<8x256xf32>
    %36 = tpu.matmul %35, %34, %cst_9 {dimension_numbers = #tpu.dot_dimension_numbers<[1], [0], [0], [1], [0, 0, 1, 1], [], []>} : vector<8x72xf32>, vector<72x256xf32>, vector<8x256xf32> -> vector<8x256xf32>
    %c0_10 = arith.constant 0 : index
    %c0_11 = arith.constant 0 : index
    %37 = vector.load %arg3[%c0_10, %c0_11] : memref<8x1xf32, #tpu.memory_space<vmem>>, vector<8x1xf32>
    %38 = vector.broadcast %37 : vector<8x1xf32> to vector<8x256xf32>
    %39 = arith.addf %36, %38 : vector<8x256xf32>
    %c0_12 = arith.constant 0 : index
    %c0_13 = arith.constant 0 : index
    %c0_14 = arith.constant 0 : index
    %40 = vector.load %arg4[%c0_12, %c0_13, %c0_14] : memref<1x8x256xf32, #tpu.memory_space<vmem>>, vector<1x8x256xf32>
    %41 = vector.shape_cast %40 : vector<1x8x256xf32> to vector<8x256xf32>
    %42 = vector.shape_cast %39 : vector<8x256xf32> to vector<1x8x256xf32>
    tpu.vector_store %arg4[%c0_12, %c0_13, %c0_14], %42 {strides = array<i32>} : memref<1x8x256xf32, #tpu.memory_space<vmem>>, vector<1x8x256xf32>,
    return
  }
  func.func @transform_0(%arg0: i32) -> (i32, i32, i32) {
    %c0_i32 = arith.constant 0 : i32
    %c0_i32_0 = arith.constant 0 : i32
    %c0_i32_1 = arith.constant 0 : i32
    return %arg0, %c0_i32, %c0_i32_0 : i32, i32, i32
  }
  func.func @transform_1(%arg0: i32) -> (i32, i32) {
    %c0_i32 = arith.constant 0 : i32
    %c0_i32_0 = arith.constant 0 : i32
    %c0_i32_1 = arith.constant 0 : i32
    return %c0_i32, %c0_i32_0 : i32, i32
  }
  func.func @transform_2(%arg0: i32) -> (i32, i32) {
    %c0_i32 = arith.constant 0 : i32
    %c0_i32_0 = arith.constant 0 : i32
    %c0_i32_1 = arith.constant 0 : i32
    return %c0_i32, %c0_i32_0 : i32, i32
  }
  func.func @transform_3(%arg0: i32) -> (i32, i32, i32) {
    %c0_i32 = arith.constant 0 : i32
    %c0_i32_0 = arith.constant 0 : i32
    %c0_i32_1 = arith.constant 0 : i32
    return %arg0, %c0_i32, %c0_i32_0 : i32, i32, i32
  }
}

</mosaic_0001>

<llo_original>
// kernel: tpu_custom_call.1
$region0: #{tpu_custom_call.1}
  #allocation0 [shape = 'u32[]', space=smem, size = 0x4, offset = 0x4, fixed_abs, tag = 'smem constant byte address 0x4 - core index']
  #allocation1 [shape = 'u32[72,128]{1,0:T(1,128)}', space=vmem, size = 0x9000, scoped, tag = 'internal scratch']
  %s0 = inlined_call_operand.hbm [shape: f32[2,8,256], index: 0, kind: input, shape index: {}]
  %s1 = inlined_call_operand.vmem [shape: f32[8,72], index: 1, kind: input, shape index: {}]
  %s2 = inlined_call_operand.vmem [shape: f32[8,1], index: 2, kind: input, shape index: {}]
  %s3 = inlined_call_operand.hbm [shape: f32[2,8,256], index: 3, kind: output, shape index: {}]
  %s4 = sld [smem:[#allocation0]]
  $region49: #{tpu_custom_call.1} parent=0
    _
  %s6 = ssub.s32 1, %s4
  %s7 = scalar_select 0, %s6, %s4
  $region1: #{tpu_custom_call.1} parent=0
    #allocation2 [shape = 'u8[16384]{0}', space=vmem, size = 0x4000, scoped, tag = 'input window, operand 0']
    #allocation3 [shape = 's32[2]{0}', space=sflag, size = 0x8, scoped, tag = 'scoped memory for tpu_custom_call.1']
    #allocation4 [shape = 's32[2]{0}', space=sflag, size = 0x8, scoped, tag = 'scoped memory for tpu_custom_call.1']
    #allocation5 [shape = 'u8[16384]{0}', space=vmem, size = 0x4000, scoped, tag = 'output window, operand 0']
    %8 = vsyncpa [#allocation3], 0
    %s9 = scalar_lea.sflag [#allocation3], 1
    %10 = vsyncpa %s9, 0
    %11 = vsyncpa [#allocation4], 0
    %s12 = scalar_lea.sflag [#allocation4], 1
    %13 = vsyncpa %s12, 0
    loop: start=0, step=1, limit=4
    $region2: #{tpu_custom_call.1} parent=1 // loop_pre_header
      _
    $region3: #{tpu_custom_call.1} parent=1 // loop_header
      %s15 = sphi 0, %s19
      %p16 = scmp.ge.s32.totalorder %s15, 4
      %s25 = sphi 0, %s27
      %s28 = sphi 0, %s25
      %s29 = sphi 0, %s28
      %s45 = sphi 0, %s29
      %s49 = sphi 0, %s49
      %s51 = sphi 0, %s49
      %s52 = sphi 0, %s51
      %s66 = sphi 0, %s52
      %s70 = sphi 0, %s70
      %s72 = sphi 0, %s70
      %s73 = sphi 0, %s72
      %s87 = sphi 0, %s73
      %s93 = sphi 0, %s95
      %s96 = sphi 0, %s93
      %s97 = sphi 0, %s96
      %s113 = sphi 0, %s97
    $region4: #{tpu_custom_call.1} parent=1 // loop_header_branch
      %18 = sbr.rel (%p16) target = $region8
    $region5: #{tpu_custom_call.1} parent=1 // loop_body
      %s20 = ssub.s32 %s15, 1
      %s21 = ssub.s32 %s15, 2
      %s22 = sadd.s32 %s15, 1
      %s23 = ssub.s32 %s15, %s22
      %p24 = scmp.eq.s32.totalorder %s23, 0
      %s26 = sadd.s32 %s25, 1
      %s27 = scalar_select %p24, %s25, %s26
      %p30 = pneg %p24
      %p31 = scmp.eq.s32.totalorder %s15, 1
      %p32 = por %p30, %p31
      %p33 = scmp.ne.s32.totalorder %s25, %s28
      %p34 = scmp.eq.s32.totalorder %s15, 0
      %p35 = por %p33, %p34
      %p36 = scmp.ne.s32.totalorder %s25, %s28
      %p37 = scmp.eq.s32.totalorder %s20, 1
      %p38 = por %p36, %p37
      %p39 = scmp.ne.s32.totalorder %s28, %s29
      %p40 = scmp.eq.s32.totalorder %s20, 0
      %p41 = por %p39, %p40
      %p42 = scmp.ne.s32.totalorder %s28, %s29
      %p43 = scmp.eq.s32.totalorder %s21, 1
      %p44 = por %p42, %p43
      %p46 = scmp.ne.s32.totalorder %s29, %s45
      %p47 = scmp.eq.s32.totalorder %s21, 0
      %p48 = por %p46, %p47
      %s50 = sadd.s32 %s49, 1
      %p53 = scmp.eq.s32.totalorder %s15, 1
      %p54 = scmp.ne.s32.totalorder %s49, %s51
      %p55 = scmp.eq.s32.totalorder %s15, 0
      %p56 = por %p54, %p55
      %p57 = scmp.ne.s32.totalorder %s49, %s51
      %p58 = scmp.eq.s32.totalorder %s20, 1
      %p59 = por %p57, %p58
      %p60 = scmp.ne.s32.totalorder %s51, %s52
      %p61 = scmp.eq.s32.totalorder %s20, 0
      %p62 = por %p60, %p61
      %p63 = scmp.ne.s32.totalorder %s51, %s52
      %p64 = scmp.eq.s32.totalorder %s21, 1
      %p65 = por %p63, %p64
      %p67 = scmp.ne.s32.totalorder %s52, %s66
      %p68 = scmp.eq.s32.totalorder %s21, 0
      %p69 = por %p67, %p68
      %s71 = sadd.s32 %s70, 1
      %p74 = scmp.eq.s32.totalorder %s15, 1
      %p75 = scmp.ne.s32.totalorder %s70, %s72
      %p76 = scmp.eq.s32.totalorder %s15, 0
      %p77 = por %p75, %p76
      %p78 = scmp.ne.s32.totalorder %s70, %s72
      %p79 = scmp.eq.s32.totalorder %s20, 1
      %p80 = por %p78, %p79
      %p81 = scmp.ne.s32.totalorder %s72, %s73
      %p82 = scmp.eq.s32.totalorder %s20, 0
      %p83 = por %p81, %p82
      %p84 = scmp.ne.s32.totalorder %s72, %s73
      %p85 = scmp.eq.s32.totalorder %s21, 1
      %p86 = por %p84, %p85
      %p88 = scmp.ne.s32.totalorder %s73, %s87
      %p89 = scmp.eq.s32.totalorder %s21, 0
      %p90 = por %p88, %p89
      %s91 = ssub.s32 %s15, %s22
      %p92 = scmp.eq.s32.totalorder %s91, 0
      %s94 = sadd.s32 %s93, 1
      %s95 = scalar_select %p92, %s93, %s94
      %p98 = pneg %p92
      %p99 = scmp.eq.s32.totalorder %s15, 1
      %p100 = por %p98, %p99
      %p101 = scmp.ne.s32.totalorder %s93, %s96
      %p102 = scmp.eq.s32.totalorder %s15, 0
      %p103 = por %p101, %p102
      %p104 = scmp.ne.s32.totalorder %s93, %s96
      %p105 = scmp.eq.s32.totalorder %s20, 1
      %p106 = por %p104, %p105
      %p107 = scmp.ne.s32.totalorder %s96, %s97
      %p108 = scmp.eq.s32.totalorder %s20, 0
      %p109 = por %p107, %p108
      %p110 = scmp.ne.s32.totalorder %s96, %s97
      %p111 = scmp.eq.s32.totalorder %s21, 1
      %p112 = por %p110, %p111
      %p114 = scmp.ne.s32.totalorder %s97, %s113
      %p115 = scmp.eq.s32.totalorder %s21, 0
      %p116 = por %p114, %p115
      %p117 = scmp.le.s32.totalorder 1, %s15
      %p118 = scmp.lt.s32.totalorder %s15, 3
      %p119 = pnand %p117, %p118
      %p120 = pneg %p119
      // Predicated region
      $region9: #{tpu_custom_call.1} parent=5 // pred_check
        _
      $region10: #{tpu_custom_call.1} parent=5 // pred_check_branch
        %122 = sbr.rel (%p119) target = $region12
      $region11: #{tpu_custom_call.1} parent=5 // pred_region
        %s123 = ssub.s32 %s15, 1
        // Predicated region
        $region13: #{tpu_custom_call.1} parent=11 // pred_check
          %p124 = pneg %p62
        $region14: #{tpu_custom_call.1} parent=11 // pred_check_branch
          %126 = sbr.rel (%p124) target = $region16
        $region15: #{tpu_custom_call.1} parent=11 // pred_region
          _
        $region16: #{tpu_custom_call.1} parent=11 // pred_fallthru
          _
        // Predicated region
        $region17: #{tpu_custom_call.1} parent=11 // pred_check
          %p127 = pneg %p83
        $region18: #{tpu_custom_call.1} parent=11 // pred_check_branch
          %129 = sbr.rel (%p127) target = $region20
        $region19: #{tpu_custom_call.1} parent=11 // pred_region
          _
        $region20: #{tpu_custom_call.1} parent=11 // pred_fallthru
          _
      $region12: #{tpu_custom_call.1} parent=5 // pred_fallthru
        _
      %p130 = scmp.lt.s32.totalorder %s15, 2
      // Predicated region
      $region21: #{tpu_custom_call.1} parent=5 // pred_check
        %p131 = pneg %p130
      $region22: #{tpu_custom_call.1} parent=5 // pred_check_branch
        %133 = sbr.rel (%p131) target = $region24
      $region23: #{tpu_custom_call.1} parent=5 // pred_region
        // Predicated region
        $region25: #{tpu_custom_call.1} parent=23 // pred_check
          %p134 = pneg %p35
        $region26: #{tpu_custom_call.1} parent=23 // pred_check_branch
          %136 = sbr.rel (%p134) target = $region28
        $region27: #{tpu_custom_call.1} parent=23 // pred_region
          %s137 = sand.u32 %s25, 1
          %s138 = scalar_lea.sflag [#allocation3], %s137
          %s139 = sand.u32 %s25, 1
          %s140 = smul.addr %s139, 16
          %s141 = scalar_lea.vmem [#allocation2], %s140
          %143 = vsyncadd %s138, 0
          %s144 = smul.addr %s15, 2
          %s145 = smul.addr %s144, 8
          %s146 = scalar_lea.hbm %s0, %s145
          %s148 = sshll.u32 %s146, 4
          %s149 = int_to_ptr.hbm [resolvable:$true] %s148
          %s150 = sshll.u32 %s141, 4
          %s151 = int_to_ptr.vmem [resolvable:$true] %s150
          %153 = dma.hbm_to_vmem [thread:$0]  %s149, 256, %s151, %s138
        $region28: #{tpu_custom_call.1} parent=23 // pred_fallthru
          _
      $region24: #{tpu_custom_call.1} parent=5 // pred_fallthru
        _
      %p154 = scmp.le.s32.totalorder 1, %s15
      %p155 = scmp.lt.s32.totalorder %s15, 3
      %p156 = pnand %p154, %p155
      %p157 = pneg %p156
      // Predicated region
      $region29: #{tpu_custom_call.1} parent=5 // pred_check
        _
      $region30: #{tpu_custom_call.1} parent=5 // pred_check_branch
        %159 = sbr.rel (%p156) target = $region32
      $region31: #{tpu_custom_call.1} parent=5 // pred_region
        %s160 = ssub.s32 %s15, 1
        %s161 = sand.u32 %s28, 1
        %s162 = scalar_lea.sflag [#allocation3], %s161
        %s163 = sand.u32 %s28, 1
        %s164 = smul.addr %s163, 16
        %s165 = scalar_lea.vmem [#allocation2], %s164
        // Predicated region
        $region33: #{tpu_custom_call.1} parent=31 // pred_check
          %p166 = pneg %p41
        $region34: #{tpu_custom_call.1} parent=31 // pred_check_branch
          %168 = sbr.rel (%p166) target = $region36
        $region35: #{tpu_custom_call.1} parent=31 // pred_region
          %170 = dma.done %s162, 256
        $region36: #{tpu_custom_call.1} parent=31 // pred_fallthru
          _
        %s171 = sand.u32 %s28, 1
        %s172 = scalar_lea.sflag [#allocation3], %s171
        %s173 = sand.u32 %s28, 1
        %s174 = smul.addr %s173, 16
        %s175 = scalar_lea.vmem [#allocation2], %s174
        %p176 = pneg %p41
        %p177 = pneg %p38
        %p178 = pneg %p62
        %p179 = pneg %p59
        %p180 = pneg %p83
        %p181 = pneg %p80
        %p182 = pneg %p109
        %p183 = pneg %p106
        %s184 = sand.u32 %s96, 1
        %s185 = scalar_lea.sflag [#allocation4], %s184
        %s186 = sand.u32 %s96, 1
        %s187 = smul.addr %s186, 16
        %s188 = scalar_lea.vmem [#allocation5], %s187
        %v189 = vld [vmem:[%s165] sm:$0xff]
        %v190 = vld [vmem:[%s165 + $0x8] sm:$0xff]
        %v191 = vlaneseq
        %v192 = vand.u32 %v191, 127
        %v193 = vadd.s32 %v192, 128
        %v194 = vand.u32 %v192, 15
        %v195 = vand.u32 %v193, 15
        %vm196 = vcmp.ge.s32.totalorder %v192, 16
        %vm197 = vcmp.ge.s32.totalorder %v193, 16
        %vm198 = vcmp.lt.s32.totalorder %v192, 240
        %vm199 = vcmp.lt.s32.totalorder %v193, 240
        %vm200 = vcmp.ge.s32.totalorder %v194, 1
        %vm201 = vcmp.ge.s32.totalorder %v195, 1
        %vm202 = vcmp.lt.s32.totalorder %v194, 15
        %vm203 = vcmp.lt.s32.totalorder %v195, 15
        %204 = vrot.lane.b32.xlu0 %v189, 17
        %v205 = vpop.permute.xlu0 %204
        %206 = vrot.lane.b32.xlu0 %v190, 17
        %v207 = vpop.permute.xlu0 %206
        %vm208 = vcmp.lt.s32.totalorder %v192, 17
        %v209 = vsel %vm208, %v205, %v207
        %v210 = vsel %vm208, %v207, %v205
        %vm211 = vmand %vm196, %vm200
        %vm212 = vmand %vm197, %vm201
        %v213 = vsel %vm211, %v210, 0.0
        %v214 = vsel %vm212, %v209, 0.0
        %215 = vrot.lane.b32.xlu0 %v189, 16
        %v216 = vpop.permute.xlu0 %215
        %217 = vrot.lane.b32.xlu0 %v190, 16
        %v218 = vpop.permute.xlu0 %217
        %vm219 = vcmp.lt.s32.totalorder %v192, 16
        %v220 = vsel %vm219, %v216, %v218
        %v221 = vsel %vm219, %v218, %v216
        %v222 = vsel %vm196, %v221, 0.0
        %v223 = vsel %vm197, %v220, 0.0
        %224 = vrot.lane.b32.xlu0 %v189, 15
        %v225 = vpop.permute.xlu0 %224
        %226 = vrot.lane.b32.xlu0 %v190, 15
        %v227 = vpop.permute.xlu0 %226
        %vm228 = vcmp.lt.s32.totalorder %v192, 15
        %v229 = vsel %vm228, %v225, %v227
        %v230 = vsel %vm228, %v227, %v225
        %vm231 = vmand %vm196, %vm202
        %vm232 = vmand %vm197, %vm203
        %v233 = vsel %vm231, %v230, 0.0
        %v234 = vsel %vm232, %v229, 0.0
        %235 = vrot.lane.b32.xlu0 %v189, 1
        %v236 = vpop.permute.xlu0 %235
        %237 = vrot.lane.b32.xlu0 %v190, 1
        %v238 = vpop.permute.xlu0 %237
        %vm239 = vcmp.lt.s32.totalorder %v192, 1
        %v240 = vsel %vm239, %v236, %v238
        %v241 = vsel %vm239, %v238, %v236
        %v242 = vsel %vm200, %v241, 0.0
        %v243 = vsel %vm201, %v240, 0.0
        %244 = vrot.lane.b32.xlu0 %v189, 127
        %v245 = vpop.permute.xlu0 %244
        %246 = vrot.lane.b32.xlu0 %v190, 127
        %v247 = vpop.permute.xlu0 %246
        %vm248 = vcmp.lt.s32.totalorder %v192, 127
        %v249 = vsel %vm248, %v245, %v247
        %v250 = vsel %vm248, %v247, %v245
        %v251 = vsel %vm202, %v249, 0.0
        %v252 = vsel %vm203, %v250, 0.0
        %253 = vrot.lane.b32.xlu0 %v189, 113
        %v254 = vpop.permute.xlu0 %253
        %255 = vrot.lane.b32.xlu0 %v190, 113
        %v256 = vpop.permute.xlu0 %255
        %vm257 = vcmp.lt.s32.totalorder %v192, 113
        %v258 = vsel %vm257, %v254, %v256
        %v259 = vsel %vm257, %v256, %v254
        %vm260 = vmand %vm198, %vm200
        %vm261 = vmand %vm199, %vm201
        %v262 = vsel %vm260, %v258, 0.0
        %v263 = vsel %vm261, %v259, 0.0
        %264 = vrot.lane.b32.xlu0 %v189, 112
        %v265 = vpop.permute.xlu0 %264
        %266 = vrot.lane.b32.xlu0 %v190, 112
        %v267 = vpop.permute.xlu0 %266
        %vm268 = vcmp.lt.s32.totalorder %v192, 112
        %v269 = vsel %vm268, %v265, %v267
        %v270 = vsel %vm268, %v267, %v265
        %v271 = vsel %vm198, %v269, 0.0
        %v272 = vsel %vm199, %v270, 0.0
        %273 = vrot.lane.b32.xlu0 %v189, 111
        %v274 = vpop.permute.xlu0 %273
        %275 = vrot.lane.b32.xlu0 %v190, 111
        %v276 = vpop.permute.xlu0 %275
        %vm277 = vcmp.lt.s32.totalorder %v192, 111
        %v278 = vsel %vm277, %v274, %v276
        %v279 = vsel %vm277, %v276, %v274
        %vm280 = vmand %vm198, %vm202
        %vm281 = vmand %vm199, %vm203
        %v282 = vsel %vm280, %v278, 0.0
        %v283 = vsel %vm281, %v279, 0.0
        %v284 = vld [vmem:[%s1] sm:$0xff]
        %v285 = vld [vmem:[%s2] sm:$0xff]
        %287 = vset.pattern.permute.xlu0 0
        %288 = vperm.xlu0 %287, %v285
        %v289 = vpop.permute.xlu0 %288
        %vm291 = vcmask 588800
        %v293 = vsel %vm291, %v284, 0
        %295 = vmatpush.msra.mxu0 0.0
        %296 = vmatpush.msra.mxu0 0.0
        %297 = vmatpush.msra.mxu0 0.0
        %298 = vmatpush.msra.mxu0 0.0
        %299 = vmatpush.msra.mxu0 0.0
        %300 = vmatpush.msra.mxu0 0.0
        %301 = vmatpush.msra.mxu0 0.0
        %302 = vmatpush.msra.mxu0 %v282
        %303 = vmatpush.msra.mxu0 %v271
        %304 = vmatpush.msra.mxu0 %v262
        %305 = vmatpush.msra.mxu0 %v251
        %306 = vmatpush.msra.mxu0 %v189
        %307 = vmatpush.msra.mxu0 %v242
        %308 = vmatpush.msra.mxu0 %v233
        %309 = vmatpush.msra.mxu0 %v222
        %310 = vmatpush.msra.mxu0 %v213
        %311 = vmatmul.f32.gmra.mxu0 %v293
        %v312 = vpop.f32.mrf.mxu0
        %v313 = vadd.f32 %v289, %v312
        %314 = vdwg.mxu0
        %315 = vmatpush.msra.mxu0 0.0
        %316 = vmatpush.msra.mxu0 0.0
        %317 = vmatpush.msra.mxu0 0.0
        %318 = vmatpush.msra.mxu0 0.0
        %319 = vmatpush.msra.mxu0 0.0
        %320 = vmatpush.msra.mxu0 0.0
        %321 = vmatpush.msra.mxu0 0.0
        %322 = vmatpush.msra.mxu0 %v283
        %323 = vmatpush.msra.mxu0 %v272
        %324 = vmatpush.msra.mxu0 %v263
        %325 = vmatpush.msra.mxu0 %v252
        %326 = vmatpush.msra.mxu0 %v190
        %327 = vmatpush.msra.mxu0 %v243
        %328 = vmatpush.msra.mxu0 %v234
        %329 = vmatpush.msra.mxu0 %v223
        %330 = vmatpush.msra.mxu0 %v214
        %331 = vmatmul.f32.gmra.mxu0 %v293
        %v332 = vpop.f32.mrf.mxu0
        %v333 = vadd.f32 %v289, %v332
        %334 = vdwg.mxu0
        %335 = vst [vmem:[%s188] sm:$0xff] %v313
        %336 = vst [vmem:[%s188 + $0x8] sm:$0xff] %v333
        %s337 = sand.u32 %s96, 1
        %s338 = scalar_lea.sflag [#allocation4], %s337
        %s339 = sand.u32 %s96, 1
        %s340 = smul.addr %s339, 16
        %s341 = scalar_lea.vmem [#allocation5], %s340
        // Predicated region
        $region37: #{tpu_custom_call.1} parent=31 // pred_check
          %p342 = pneg %p106
        $region38: #{tpu_custom_call.1} parent=31 // pred_check_branch
          %344 = sbr.rel (%p342) target = $region40
        $region39: #{tpu_custom_call.1} parent=31 // pred_region
          %346 = vsyncadd %s338, 0
          %s347 = smul.addr %s20, 2
          %s348 = smul.addr %s347, 8
          %s349 = scalar_lea.hbm %s3, %s348
          %s351 = sshll.u32 %s341, 4
          %s352 = int_to_ptr.vmem [resolvable:$true] %s351
          %s353 = sshll.u32 %s349, 4
          %s354 = int_to_ptr.hbm [resolvable:$true] %s353
          %356 = dma.vmem_to_hbm [thread:$0]  %s352, 256, %s354, %s338
        $region40: #{tpu_custom_call.1} parent=31 // pred_fallthru
          _
      $region32: #{tpu_custom_call.1} parent=5 // pred_fallthru
        _
      %p357 = scmp.le.s32.totalorder 2, %s15
      // Predicated region
      $region41: #{tpu_custom_call.1} parent=5 // pred_check
        %p358 = pneg %p357
      $region42: #{tpu_custom_call.1} parent=5 // pred_check_branch
        %360 = sbr.rel (%p358) target = $region44
      $region43: #{tpu_custom_call.1} parent=5 // pred_region
        %s361 = ssub.s32 %s15, 2
        // Predicated region
        $region45: #{tpu_custom_call.1} parent=43 // pred_check
          %p362 = pneg %p112
        $region46: #{tpu_custom_call.1} parent=43 // pred_check_branch
          %364 = sbr.rel (%p362) target = $region48
        $region47: #{tpu_custom_call.1} parent=43 // pred_region
          %s365 = sand.u32 %s97, 1
          %s366 = scalar_lea.sflag [#allocation4], %s365
          %s367 = sand.u32 %s97, 1
          %s368 = smul.addr %s367, 16
          %s369 = scalar_lea.vmem [#allocation5], %s368
          %371 = dma.done %s366, 256
        $region48: #{tpu_custom_call.1} parent=43 // pred_fallthru
          _
      $region44: #{tpu_custom_call.1} parent=5 // pred_fallthru
        _
    $region6: #{tpu_custom_call.1} parent=1 // loop_footer
      %s19 = sadd.s32 1, %s15
    $region7: #{tpu_custom_call.1} parent=1 // loop_footer_branch
      %14 = sbr.rel target = $region3
    $region8: #{tpu_custom_call.1} parent=1 // loop_exit
      _
    %372 = vsyncpa [#allocation3], 1
    %s373 = scalar_lea.sflag [#allocation3], 1
    %374 = vsyncpa %s373, 1
    %375 = vsyncpa [#allocation4], 1
    %s376 = scalar_lea.sflag [#allocation4], 1
    %377 = vsyncpa %s376, 1

</llo_original>
